<compile_context>
chip_gen: v7x
topology: tpu7x:2x2x1
jax: 0.10.0
libtpu: 0.0.40
codegen_flags: <defaults>
</compile_context>

<pallas_src>
import functools
import math

import jax
import jax.numpy as jnp
from jax.experimental import pallas as pl
from jax.experimental.pallas import tpu as pltpu


def _round_up(x, m):
    return ((x + m - 1) // m) * m


def _tpu_vmem_capacity_bytes():
    try:
        return int(pltpu.get_tpu_info().vmem_capacity_bytes)
    except Exception:
        return 64 << 20  # conservative fallback (v7x-sized)


def adapter_kernel(x_ref, gamma_ref, beta_ref, w1_ref, b1_ref, w2_ref, b2_ref,
                   o_ref, *, eps, mxu_dtype):
    # x_ref: (TM, C) tile of the flattened input
    x = x_ref[...].astype(jnp.float32)

    # --- LayerNorm over last dim, single-pass stats (biased var, eps=1e-5) ---
    mean = jnp.mean(x, axis=-1, keepdims=True)
    mean_sq = jnp.mean(x * x, axis=-1, keepdims=True)
    var = mean_sq - mean * mean
    xn = (x - mean) * jax.lax.rsqrt(var + eps)
    xn = xn * gamma_ref[...] + beta_ref[...]

    # --- fc[0]: Linear(C -> C//r); weights pre-cast to mxu_dtype in wrapper ---
    h = jnp.dot(xn.astype(mxu_dtype), w1_ref[...],
                preferred_element_type=jnp.float32) + b1_ref[...]

    # --- QuickGELU: x * sigmoid(1.702 * x) ---
    h = h * jax.nn.sigmoid(1.702 * h)

    # --- fc[2]: Linear(C//r -> C) ---
    out = jnp.dot(h.astype(mxu_dtype), w2_ref[...],
                  preferred_element_type=jnp.float32) + b2_ref[...]

    # --- residual (against the pre-LN input) ---
    o_ref[...] = (x + out).astype(o_ref.dtype)


def adapter_forward(x, params, *, tm=None, eps=1e-5, donate_x=False):
    """x: (b, h, w, c) channels-last. Returns same shape/dtype.

    Set donate_x=True only if the caller donates x (jit donate_argnums);
    otherwise XLA would insert a defensive copy for the alias.
    """
    b, h, w, c = x.shape
    n = b * h * w
    hid = params["w1"].shape[1]
    x_bytes = jnp.dtype(x.dtype).itemsize

    vmem_cap = _tpu_vmem_capacity_bytes()
    big_vmem = vmem_cap >= (96 << 20)           # v5e/v6e: 128 MiB, v7x: 64 MiB

    # Per-row VMEM bytes: double-buffered in/out pipeline tiles (+4 * C * xbytes)
    # plus ~4 live f32 (TM, C) temporaries inside the kernel (x, xn, out, slack).
    per_row = 4 * c * x_bytes + 16 * c
    budget = (48 << 20) if big_vmem else (24 << 20)
    max_tm = max(8, (budget // per_row) // 8 * 8)
    tm_cap = tm if tm is not None else (2048 if big_vmem else 1024)
    tm_eff = max(8, min(tm_cap, _round_up(n, 8), max_tm))

    # v7x has 2 TensorCores: ensure the "parallel" grid has at least 2 steps
    # so both cores get work (harmless one extra ~0.35us step on 1-TC chips).
    if n >= 16 and pl.cdiv(n, tm_eff) == 1:
        tm_eff = max(8, _round_up(pl.cdiv(n, 2), 8))

    grid = (pl.cdiv(n, tm_eff),)   # partial last tile allowed: no jnp.pad/slice

    x2d = x.reshape(n, c)

    # bf16 MXU operands for mid/production-sized channels (v5e MXU has no native
    # f32 path); f32 for tiny demo C so the tight correctness check holds.
    mxu_dtype = jnp.bfloat16 if c >= 256 else jnp.float32

    gamma = params["gamma"].reshape(1, c).astype(jnp.float32)
    beta = params["beta"].reshape(1, c).astype(jnp.float32)
    w1 = params["w1"].astype(mxu_dtype)          # cast once, outside the kernel
    w2 = params["w2"].astype(mxu_dtype)
    b1 = params["b1"].reshape(1, hid).astype(jnp.float32)
    b2 = params["b2"].reshape(1, c).astype(jnp.float32)

    w_bytes = ((c * hid + hid * c) * jnp.dtype(mxu_dtype).itemsize
               + (4 * c + 2 * hid) * 4)
    need = tm_eff * per_row + 2 * w_bytes + (4 << 20)     # +compiler headroom
    vmem_limit = int(min((100 << 20) if big_vmem else (48 << 20),
                         max(32 << 20, need)))

    out2d = pl.pallas_call(
        functools.partial(adapter_kernel, eps=eps, mxu_dtype=mxu_dtype),
        out_shape=jax.ShapeDtypeStruct((n, c), x.dtype),
        grid_spec=pltpu.PrefetchScalarGridSpec(
            num_scalar_prefetch=0,
            grid=grid,
            in_specs=[
                pl.BlockSpec((tm_eff, c), lambda i: (i, 0)),  # x tile
                pl.BlockSpec((1, c), lambda i: (0, 0)),       # LN gamma (resident)
                pl.BlockSpec((1, c), lambda i: (0, 0)),       # LN beta  (resident)
                pl.BlockSpec((c, hid), lambda i: (0, 0)),     # w1       (resident)
                pl.BlockSpec((1, hid), lambda i: (0, 0)),     # b1       (resident)
                pl.BlockSpec((hid, c), lambda i: (0, 0)),     # w2       (resident)
                pl.BlockSpec((1, c), lambda i: (0, 0)),       # b2       (resident)
            ],
            out_specs=pl.BlockSpec((tm_eff, c), lambda i: (i, 0)),
        ),
        compiler_params=pltpu.CompilerParams(
            dimension_semantics=("parallel",),
            vmem_limit_bytes=vmem_limit),
        input_output_aliases=({0: 0} if donate_x else {}),
    )(x2d, gamma, beta, w1, b1, w2, b2)

    return out2d.reshape(b, h, w, c)


def init_params(key, c, r):
    """Deterministic init matching the module's init_weights():
    Linear weights: xavier_uniform, biases: normal(std=1e-6).
    LayerNorm: weight=1, bias=0 (PyTorch default)."""
    hid = c // r
    k1, k2, k3, k4 = jax.random.split(key, 4)

    def xavier_uniform(k, fan_in, fan_out):
        bound = math.sqrt(6.0 / (fan_in + fan_out))
        # stored as (in, out) so the kernel does x @ w
        return jax.random.uniform(k, (fan_in, fan_out), jnp.float32,
                                  minval=-bound, maxval=bound)

    return {
        "w1": xavier_uniform(k1, c, hid),
        "b1": jax.random.normal(k2, (hid,), jnp.float32) * 1e-6,
        "w2": xavier_uniform(k3, hid, c),
        "b2": jax.random.normal(k4, (c,), jnp.float32) * 1e-6,
        "gamma": jnp.ones((c,), jnp.float32),
        "beta": jnp.zeros((c,), jnp.float32),
    }


def adapter_reference(x, params, eps=1e-5):
    """Pure-JAX reference for correctness check."""
    b, h, w, c = x.shape
    x2d = x.reshape(b, h * w, c).astype(jnp.float32)
    mean = jnp.mean(x2d, axis=-1, keepdims=True)
    var = jnp.mean((x2d - mean) ** 2, axis=-1, keepdims=True)
    xn = (x2d - mean) / jnp.sqrt(var + eps) * params["gamma"] + params["beta"]
    hdd = xn @ params["w1"] + params["b1"]
    hdd = hdd * jax.nn.sigmoid(1.702 * hdd)
    out = hdd @ params["w2"] + params["b2"]
    return x + out.reshape(b, h, w, c).astype(x.dtype)


if __name__ == "__main__":
    key = jax.random.PRNGKey(0)
    fwd = jax.jit(adapter_forward)

    # Case 1: small shape (c divisible by r=16), f32 MXU path, tight tolerance.
    B, H, W, C, R = 2, 4, 4, 128, 16
    kx, kp = jax.random.split(key)
    x = jax.random.normal(kx, (B, H, W, C), jnp.float32)
    params = init_params(kp, C, R)

    out = fwd(x, params)
    jax.block_until_ready(out)
    ref = adapter_reference(x, params)
    assert out.shape == x.shape and out.dtype == x.dtype
    assert jnp.allclose(out, ref, atol=1e-4, rtol=1e-4), "mismatch vs reference"

    # Case 2: row count not a multiple of the tile / of 8 -> exercises the
    # partial last tile (no padding, no final slice).
    B2, H2, W2 = 2, 7, 9  # n = 126 rows
    kx2 = jax.random.fold_in(kx, 1)
    x2 = jax.random.normal(kx2, (B2, H2, W2, C), jnp.float32)
    out2 = fwd(x2, params)
    jax.block_until_ready(out2)
    ref2 = adapter_reference(x2, params)
    assert out2.shape == x2.shape and out2.dtype == x2.dtype
    assert jnp.allclose(out2, ref2, atol=1e-4, rtol=1e-4), "mismatch (ragged tail)"

    # Case 3: production-sized channels (module default c=768, r=16) -> bf16
    # MXU operand path, validated with a looser tolerance.
    C3, R3 = 768, 16
    B3, H3, W3 = 1, 8, 8
    kp3 = jax.random.fold_in(kp, 2)
    kx3 = jax.random.fold_in(kx, 2)
    params3 = init_params(kp3, C3, R3)
    x3 = jax.random.normal(kx3, (B3, H3, W3, C3), jnp.float32)
    out3 = fwd(x3, params3)
    jax.block_until_ready(out3)
    ref3 = adapter_reference(x3, params3)
    assert out3.shape == x3.shape and out3.dtype == x3.dtype
    assert jnp.allclose(out3, ref3, atol=5e-2, rtol=5e-2), "mismatch (bf16 MXU path)"

    print("KERNEL_OK")
</pallas_src>

<mosaic_0001>
module attributes {stable_mosaic.version = 11 : i64} {
  func.func @adapter_kernel(%arg0: i32, %arg1: memref<16x128xf32, #tpu.memory_space<vmem>>, %arg2: memref<1x128xf32, #tpu.memory_space<vmem>>, %arg3: memref<1x128xf32, #tpu.memory_space<vmem>>, %arg4: memref<128x8xf32, #tpu.memory_space<vmem>>, %arg5: memref<1x8xf32, #tpu.memory_space<vmem>>, %arg6: memref<8x128xf32, #tpu.memory_space<vmem>>, %arg7: memref<1x128xf32, #tpu.memory_space<vmem>>, %arg8: memref<16x128xf32, #tpu.memory_space<vmem>>) attributes {dimension_semantics = [#tpu.dimension_semantics<parallel>], iteration_bounds = array<i64: 2>, scalar_prefetch = 0 : i64, scratch_operands = 0 : i64, tpu.core_type = #tpu.core_type<tc>, window_params = [{transform_indices = @transform_0, window_bounds = array<i64: 16, 128>}, {pipeline_mode = #tpu.pipeline_mode<synchronous>, transform_indices = @transform_1, window_bounds = array<i64: 1, 128>}, {pipeline_mode = #tpu.pipeline_mode<synchronous>, transform_indices = @transform_2, window_bounds = array<i64: 1, 128>}, {pipeline_mode = #tpu.pipeline_mode<synchronous>, transform_indices = @transform_3, window_bounds = array<i64: 128, 8>}, {pipeline_mode = #tpu.pipeline_mode<synchronous>, transform_indices = @transform_4, window_bounds = array<i64: 1, 8>}, {pipeline_mode = #tpu.pipeline_mode<synchronous>, transform_indices = @transform_5, window_bounds = array<i64: 8, 128>}, {pipeline_mode = #tpu.pipeline_mode<synchronous>, transform_indices = @transform_6, window_bounds = array<i64: 1, 128>}, {transform_indices = @transform_7, window_bounds = array<i64: 16, 128>}]} {
    %c0 = arith.constant 0 : index
    %c0_0 = arith.constant 0 : index
    %0 = vector.load %arg1[%c0, %c0_0] : memref<16x128xf32, #tpu.memory_space<vmem>>, vector<16x128xf32>
    %cst = arith.constant dense<0.000000e+00> : vector<16xf32>
    %1 = vector.multi_reduction <add>, %0, %cst [1] : vector<16x128xf32> to vector<16xf32>
    %2 = vector.shape_cast %1 : vector<16xf32> to vector<16x1xf32>
    %cst_1 = arith.constant 1.280000e+02 : f32
    %3 = vector.broadcast %cst_1 : f32 to vector<16x1xf32>
    %4 = arith.divf %2, %3 : vector<16x1xf32>
    %5 = arith.mulf %0, %0 : vector<16x128xf32>
    %cst_2 = arith.constant dense<0.000000e+00> : vector<16xf32>
    %6 = vector.multi_reduction <add>, %5, %cst_2 [1] : vector<16x128xf32> to vector<16xf32>
    %7 = vector.shape_cast %6 : vector<16xf32> to vector<16x1xf32>
    %cst_3 = arith.constant 1.280000e+02 : f32
    %8 = vector.broadcast %cst_3 : f32 to vector<16x1xf32>
    %9 = arith.divf %7, %8 : vector<16x1xf32>
    %10 = arith.mulf %4, %4 : vector<16x1xf32>
    %11 = arith.subf %9, %10 : vector<16x1xf32>
    %12 = vector.broadcast %4 : vector<16x1xf32> to vector<16x128xf32>
    %13 = arith.subf %0, %12 : vector<16x128xf32>
    %cst_4 = arith.constant 9.99999974E-6 : f32
    %14 = vector.broadcast %cst_4 : f32 to vector<16x1xf32>
    %15 = arith.addf %11, %14 : vector<16x1xf32>
    %16 = math.rsqrt %15 : vector<16x1xf32>
    %17 = vector.broadcast %16 : vector<16x1xf32> to vector<16x128xf32>
    %18 = arith.mulf %13, %17 : vector<16x128xf32>
    %c0_5 = arith.constant 0 : index
    %c0_6 = arith.constant 0 : index
    %19 = vector.load %arg2[%c0_5, %c0_6] : memref<1x128xf32, #tpu.memory_space<vmem>>, vector<1x128xf32>
    %20 = vector.broadcast %19 : vector<1x128xf32> to vector<16x128xf32>
    %21 = arith.mulf %18, %20 : vector<16x128xf32>
    %c0_7 = arith.constant 0 : index
    %c0_8 = arith.constant 0 : index
    %22 = vector.load %arg3[%c0_7, %c0_8] : memref<1x128xf32, #tpu.memory_space<vmem>>, vector<1x128xf32>
    %23 = vector.broadcast %22 : vector<1x128xf32> to vector<16x128xf32>
    %24 = arith.addf %21, %23 : vector<16x128xf32>
    %c0_9 = arith.constant 0 : index
    %c0_10 = arith.constant 0 : index
    %25 = vector.load %arg4[%c0_9, %c0_10] : memref<128x8xf32, #tpu.memory_space<vmem>>, vector<128x8xf32>
    %cst_11 = arith.constant dense<0.000000e+00> : vector<16x8xf32>
    %26 = tpu.matmul %24, %25, %cst_11 {dimension_numbers = #tpu.dot_dimension_numbers<[1], [0], [0], [1], [0, 0, 1, 1], [], []>} : vector<16x128xf32>, vector<128x8xf32>, vector<16x8xf32> -> vector<16x8xf32>
    %c0_12 = arith.constant 0 : index
    %c0_13 = arith.constant 0 : index
    %27 = vector.load %arg5[%c0_12, %c0_13] : memref<1x8xf32, #tpu.memory_space<vmem>>, vector<1x8xf32>
    %28 = vector.broadcast %27 : vector<1x8xf32> to vector<16x8xf32>
    %29 = arith.addf %26, %28 : vector<16x8xf32>
    %cst_14 = arith.constant 1.702000e+00 : f32
    %30 = vector.broadcast %cst_14 : f32 to vector<16x8xf32>
    %31 = arith.mulf %30, %29 : vector<16x8xf32>
    %32 = arith.negf %31 : vector<16x8xf32>
    %33 = math.exp %32 : vector<16x8xf32>
    %cst_15 = arith.constant 1.000000e+00 : f32
    %34 = vector.broadcast %cst_15 : f32 to vector<16x8xf32>
    %35 = arith.addf %34, %33 : vector<16x8xf32>
    %36 = arith.divf %34, %35 : vector<16x8xf32>
    %37 = arith.mulf %29, %36 : vector<16x8xf32>
    %c0_16 = arith.constant 0 : index
    %c0_17 = arith.constant 0 : index
    %38 = vector.load %arg6[%c0_16, %c0_17] : memref<8x128xf32, #tpu.memory_space<vmem>>, vector<8x128xf32>
    %cst_18 = arith.constant dense<0.000000e+00> : vector<16x128xf32>
    %39 = tpu.matmul %37, %38, %cst_18 {dimension_numbers = #tpu.dot_dimension_numbers<[1], [0], [0], [1], [0, 0, 1, 1], [], []>} : vector<16x8xf32>, vector<8x128xf32>, vector<16x128xf32> -> vector<16x128xf32>
    %c0_19 = arith.constant 0 : index
    %c0_20 = arith.constant 0 : index
    %40 = vector.load %arg7[%c0_19, %c0_20] : memref<1x128xf32, #tpu.memory_space<vmem>>, vector<1x128xf32>
    %41 = vector.broadcast %40 : vector<1x128xf32> to vector<16x128xf32>
    %42 = arith.addf %39, %41 : vector<16x128xf32>
    %43 = arith.addf %0, %42 : vector<16x128xf32>
    %c0_21 = arith.constant 0 : index
    %c0_22 = arith.constant 0 : index
    %44 = vector.load %arg8[%c0_21, %c0_22] : memref<16x128xf32, #tpu.memory_space<vmem>>, vector<16x128xf32>
    tpu.vector_store %arg8[%c0_21, %c0_22], %43 {strides = array<i32>} : memref<16x128xf32, #tpu.memory_space<vmem>>, vector<16x128xf32>,
    return
  }
  func.func @transform_0(%arg0: i32) -> (i32, i32) {
    %c0_i32 = arith.constant 0 : i32
    %c0_i32_0 = arith.constant 0 : i32
    return %arg0, %c0_i32 : i32, i32
  }
  func.func @transform_1(%arg0: i32) -> (i32, i32) {
    %c0_i32 = arith.constant 0 : i32
    %c0_i32_0 = arith.constant 0 : i32
    %c0_i32_1 = arith.constant 0 : i32
    return %c0_i32, %c0_i32_0 : i32, i32
  }
  func.func @transform_2(%arg0: i32) -> (i32, i32) {
    %c0_i32 = arith.constant 0 : i32
    %c0_i32_0 = arith.constant 0 : i32
    %c0_i32_1 = arith.constant 0 : i32
    return %c0_i32, %c0_i32_0 : i32, i32
  }
  func.func @transform_3(%arg0: i32) -> (i32, i32) {
    %c0_i32 = arith.constant 0 : i32
    %c0_i32_0 = arith.constant 0 : i32
    %c0_i32_1 = arith.constant 0 : i32
    return %c0_i32, %c0_i32_0 : i32, i32
  }
  func.func @transform_4(%arg0: i32) -> (i32, i32) {
    %c0_i32 = arith.constant 0 : i32
    %c0_i32_0 = arith.constant 0 : i32
    %c0_i32_1 = arith.constant 0 : i32
    return %c0_i32, %c0_i32_0 : i32, i32
  }
  func.func @transform_5(%arg0: i32) -> (i32, i32) {
    %c0_i32 = arith.constant 0 : i32
    %c0_i32_0 = arith.constant 0 : i32
    %c0_i32_1 = arith.constant 0 : i32
    return %c0_i32, %c0_i32_0 : i32, i32
  }
  func.func @transform_6(%arg0: i32) -> (i32, i32) {
    %c0_i32 = arith.constant 0 : i32
    %c0_i32_0 = arith.constant 0 : i32
    %c0_i32_1 = arith.constant 0 : i32
    return %c0_i32, %c0_i32_0 : i32, i32
  }
  func.func @transform_7(%arg0: i32) -> (i32, i32) {
    %c0_i32 = arith.constant 0 : i32
    %c0_i32_0 = arith.constant 0 : i32
    return %arg0, %c0_i32 : i32, i32
  }
}

</mosaic_0001>

<llo_original>
// kernel: adapter_forward.1
$region0: #{adapter_forward.1}
  #allocation0 [shape = 'u32[]', space=smem, size = 0x4, offset = 0x4, fixed_abs, tag = 'smem constant byte address 0x4 - core index']
  #allocation1 [shape = 'u32[144,128]{1,0:T(1,128)}', space=vmem, size = 0x12000, scoped, tag = 'internal scratch']
  %s0 = inlined_call_operand.vmem [shape: f32[32,128], index: 0, kind: input, shape index: {}]
  %s1 = inlined_call_operand.vmem [shape: f32[1,128], index: 1, kind: input, shape index: {}]
  %s2 = inlined_call_operand.vmem [shape: f32[1,128], index: 2, kind: input, shape index: {}]
  %s3 = inlined_call_operand.vmem [shape: f32[128,8], index: 3, kind: input, shape index: {}]
  %s4 = inlined_call_operand.vmem [shape: f32[1,8], index: 4, kind: input, shape index: {}]
  %s5 = inlined_call_operand.vmem [shape: f32[8,128], index: 5, kind: input, shape index: {}]
  %s6 = inlined_call_operand.vmem [shape: f32[1,128], index: 6, kind: input, shape index: {}]
  %s7 = inlined_call_operand.hbm [shape: f32[32,128], index: 7, kind: output, shape index: {}]
  %s8 = sld [smem:[#allocation0]]
  $region61: #{adapter_forward.1} parent=0
    _
  %s10 = ssub.s32 1, %s8
  %s11 = scalar_select 0, %s10, %s8
  $region1: #{adapter_forward.1} parent=0
    #allocation2 [shape = 'u8[16384]{0}', space=vmem, size = 0x4000, scoped, tag = 'output window, operand 0']
    #allocation3 [shape = 's32[2]{0}', space=sflag, size = 0x8, scoped, tag = 'scoped memory for adapter_forward.1']
    %12 = vsyncpa [#allocation3], 0
    %s13 = scalar_lea.sflag [#allocation3], 1
    %14 = vsyncpa %s13, 0
    loop: start=0, step=1, limit=4
    $region2: #{adapter_forward.1} parent=1 // loop_pre_header
      _
    $region3: #{adapter_forward.1} parent=1 // loop_header
      %s16 = sphi 0, %s20
      %p17 = scmp.ge.s32.totalorder %s16, 4
      %s26 = sphi 0, %s28
      %s29 = sphi 0, %s26
      %s30 = sphi 0, %s29
      %s46 = sphi 0, %s30
      %s50 = sphi 0, %s50
      %s52 = sphi 0, %s50
      %s53 = sphi 0, %s52
      %s67 = sphi 0, %s53
      %s71 = sphi 0, %s71
      %s73 = sphi 0, %s71
      %s74 = sphi 0, %s73
      %s88 = sphi 0, %s74
      %s92 = sphi 0, %s92
      %s94 = sphi 0, %s92
      %s95 = sphi 0, %s94
      %s109 = sphi 0, %s95
      %s113 = sphi 0, %s113
      %s115 = sphi 0, %s113
      %s116 = sphi 0, %s115
      %s130 = sphi 0, %s116
      %s134 = sphi 0, %s134
      %s136 = sphi 0, %s134
      %s137 = sphi 0, %s136
      %s151 = sphi 0, %s137
      %s155 = sphi 0, %s155
      %s157 = sphi 0, %s155
      %s158 = sphi 0, %s157
      %s172 = sphi 0, %s158
      %s178 = sphi 0, %s180
      %s181 = sphi 0, %s178
      %s182 = sphi 0, %s181
      %s198 = sphi 0, %s182
    $region4: #{adapter_forward.1} parent=1 // loop_header_branch
      %19 = sbr.rel (%p17) target = $region8
    $region5: #{adapter_forward.1} parent=1 // loop_body
      %s21 = ssub.s32 %s16, 1
      %s22 = ssub.s32 %s16, 2
      %s23 = sadd.s32 %s16, 1
      %s24 = ssub.s32 %s16, %s23
      %p25 = scmp.eq.s32.totalorder %s24, 0
      %s27 = sadd.s32 %s26, 1
      %s28 = scalar_select %p25, %s26, %s27
      %p31 = pneg %p25
      %p32 = scmp.eq.s32.totalorder %s16, 1
      %p33 = por %p31, %p32
      %p34 = scmp.ne.s32.totalorder %s26, %s29
      %p35 = scmp.eq.s32.totalorder %s16, 0
      %p36 = por %p34, %p35
      %p37 = scmp.ne.s32.totalorder %s26, %s29
      %p38 = scmp.eq.s32.totalorder %s21, 1
      %p39 = por %p37, %p38
      %p40 = scmp.ne.s32.totalorder %s29, %s30
      %p41 = scmp.eq.s32.totalorder %s21, 0
      %p42 = por %p40, %p41
      %p43 = scmp.ne.s32.totalorder %s29, %s30
      %p44 = scmp.eq.s32.totalorder %s22, 1
      %p45 = por %p43, %p44
      %p47 = scmp.ne.s32.totalorder %s30, %s46
      %p48 = scmp.eq.s32.totalorder %s22, 0
      %p49 = por %p47, %p48
      %s51 = sadd.s32 %s50, 1
      %p54 = scmp.eq.s32.totalorder %s16, 1
      %p55 = scmp.ne.s32.totalorder %s50, %s52
      %p56 = scmp.eq.s32.totalorder %s16, 0
      %p57 = por %p55, %p56
      %p58 = scmp.ne.s32.totalorder %s50, %s52
      %p59 = scmp.eq.s32.totalorder %s21, 1
      %p60 = por %p58, %p59
      %p61 = scmp.ne.s32.totalorder %s52, %s53
      %p62 = scmp.eq.s32.totalorder %s21, 0
      %p63 = por %p61, %p62
      %p64 = scmp.ne.s32.totalorder %s52, %s53
      %p65 = scmp.eq.s32.totalorder %s22, 1
      %p66 = por %p64, %p65
      %p68 = scmp.ne.s32.totalorder %s53, %s67
      %p69 = scmp.eq.s32.totalorder %s22, 0
      %p70 = por %p68, %p69
      %s72 = sadd.s32 %s71, 1
      %p75 = scmp.eq.s32.totalorder %s16, 1
      %p76 = scmp.ne.s32.totalorder %s71, %s73
      %p77 = scmp.eq.s32.totalorder %s16, 0
      %p78 = por %p76, %p77
      %p79 = scmp.ne.s32.totalorder %s71, %s73
      %p80 = scmp.eq.s32.totalorder %s21, 1
      %p81 = por %p79, %p80
      %p82 = scmp.ne.s32.totalorder %s73, %s74
      %p83 = scmp.eq.s32.totalorder %s21, 0
      %p84 = por %p82, %p83
      %p85 = scmp.ne.s32.totalorder %s73, %s74
      %p86 = scmp.eq.s32.totalorder %s22, 1
      %p87 = por %p85, %p86
      %p89 = scmp.ne.s32.totalorder %s74, %s88
      %p90 = scmp.eq.s32.totalorder %s22, 0
      %p91 = por %p89, %p90
      %s93 = sadd.s32 %s92, 1
      %p96 = scmp.eq.s32.totalorder %s16, 1
      %p97 = scmp.ne.s32.totalorder %s92, %s94
      %p98 = scmp.eq.s32.totalorder %s16, 0
      %p99 = por %p97, %p98
      %p100 = scmp.ne.s32.totalorder %s92, %s94
      %p101 = scmp.eq.s32.totalorder %s21, 1
      %p102 = por %p100, %p101
      %p103 = scmp.ne.s32.totalorder %s94, %s95
      %p104 = scmp.eq.s32.totalorder %s21, 0
      %p105 = por %p103, %p104
      %p106 = scmp.ne.s32.totalorder %s94, %s95
      %p107 = scmp.eq.s32.totalorder %s22, 1
      %p108 = por %p106, %p107
      %p110 = scmp.ne.s32.totalorder %s95, %s109
      %p111 = scmp.eq.s32.totalorder %s22, 0
      %p112 = por %p110, %p111
      %s114 = sadd.s32 %s113, 1
      %p117 = scmp.eq.s32.totalorder %s16, 1
      %p118 = scmp.ne.s32.totalorder %s113, %s115
      %p119 = scmp.eq.s32.totalorder %s16, 0
      %p120 = por %p118, %p119
      %p121 = scmp.ne.s32.totalorder %s113, %s115
      %p122 = scmp.eq.s32.totalorder %s21, 1
      %p123 = por %p121, %p122
      %p124 = scmp.ne.s32.totalorder %s115, %s116
      %p125 = scmp.eq.s32.totalorder %s21, 0
      %p126 = por %p124, %p125
      %p127 = scmp.ne.s32.totalorder %s115, %s116
      %p128 = scmp.eq.s32.totalorder %s22, 1
      %p129 = por %p127, %p128
      %p131 = scmp.ne.s32.totalorder %s116, %s130
      %p132 = scmp.eq.s32.totalorder %s22, 0
      %p133 = por %p131, %p132
      %s135 = sadd.s32 %s134, 1
      %p138 = scmp.eq.s32.totalorder %s16, 1
      %p139 = scmp.ne.s32.totalorder %s134, %s136
      %p140 = scmp.eq.s32.totalorder %s16, 0
      %p141 = por %p139, %p140
      %p142 = scmp.ne.s32.totalorder %s134, %s136
      %p143 = scmp.eq.s32.totalorder %s21, 1
      %p144 = por %p142, %p143
      %p145 = scmp.ne.s32.totalorder %s136, %s137
      %p146 = scmp.eq.s32.totalorder %s21, 0
      %p147 = por %p145, %p146
      %p148 = scmp.ne.s32.totalorder %s136, %s137
      %p149 = scmp.eq.s32.totalorder %s22, 1
      %p150 = por %p148, %p149
      %p152 = scmp.ne.s32.totalorder %s137, %s151
      %p153 = scmp.eq.s32.totalorder %s22, 0
      %p154 = por %p152, %p153
      %s156 = sadd.s32 %s155, 1
      %p159 = scmp.eq.s32.totalorder %s16, 1
      %p160 = scmp.ne.s32.totalorder %s155, %s157
      %p161 = scmp.eq.s32.totalorder %s16, 0
      %p162 = por %p160, %p161
      %p163 = scmp.ne.s32.totalorder %s155, %s157
      %p164 = scmp.eq.s32.totalorder %s21, 1
      %p165 = por %p163, %p164
      %p166 = scmp.ne.s32.totalorder %s157, %s158
      %p167 = scmp.eq.s32.totalorder %s21, 0
      %p168 = por %p166, %p167
      %p169 = scmp.ne.s32.totalorder %s157, %s158
      %p170 = scmp.eq.s32.totalorder %s22, 1
      %p171 = por %p169, %p170
      %p173 = scmp.ne.s32.totalorder %s158, %s172
      %p174 = scmp.eq.s32.totalorder %s22, 0
      %p175 = por %p173, %p174
      %s176 = ssub.s32 %s16, %s23
      %p177 = scmp.eq.s32.totalorder %s176, 0
      %s179 = sadd.s32 %s178, 1
      %s180 = scalar_select %p177, %s178, %s179
      %p183 = pneg %p177
      %p184 = scmp.eq.s32.totalorder %s16, 1
      %p185 = por %p183, %p184
      %p186 = scmp.ne.s32.totalorder %s178, %s181
      %p187 = scmp.eq.s32.totalorder %s16, 0
      %p188 = por %p186, %p187
      %p189 = scmp.ne.s32.totalorder %s178, %s181
      %p190 = scmp.eq.s32.totalorder %s21, 1
      %p191 = por %p189, %p190
      %p192 = scmp.ne.s32.totalorder %s181, %s182
      %p193 = scmp.eq.s32.totalorder %s21, 0
      %p194 = por %p192, %p193
      %p195 = scmp.ne.s32.totalorder %s181, %s182
      %p196 = scmp.eq.s32.totalorder %s22, 1
      %p197 = por %p195, %p196
      %p199 = scmp.ne.s32.totalorder %s182, %s198
      %p200 = scmp.eq.s32.totalorder %s22, 0
      %p201 = por %p199, %p200
      %p202 = scmp.le.s32.totalorder 1, %s16
      %p203 = scmp.lt.s32.totalorder %s16, 3
      %p204 = pnand %p202, %p203
      %p205 = pneg %p204
      // Predicated region
      $region9: #{adapter_forward.1} parent=5 // pred_check
        _
      $region10: #{adapter_forward.1} parent=5 // pred_check_branch
        %207 = sbr.rel (%p204) target = $region12
      $region11: #{adapter_forward.1} parent=5 // pred_region
        %s208 = ssub.s32 %s16, 1
        // Predicated region
        $region13: #{adapter_forward.1} parent=11 // pred_check
          %p209 = pneg %p63
        $region14: #{adapter_forward.1} parent=11 // pred_check_branch
          %211 = sbr.rel (%p209) target = $region16
        $region15: #{adapter_forward.1} parent=11 // pred_region
          _
        $region16: #{adapter_forward.1} parent=11 // pred_fallthru
          _
        // Predicated region
        $region17: #{adapter_forward.1} parent=11 // pred_check
          %p212 = pneg %p84
        $region18: #{adapter_forward.1} parent=11 // pred_check_branch
          %214 = sbr.rel (%p212) target = $region20
        $region19: #{adapter_forward.1} parent=11 // pred_region
          _
        $region20: #{adapter_forward.1} parent=11 // pred_fallthru
          _
        // Predicated region
        $region21: #{adapter_forward.1} parent=11 // pred_check
          %p215 = pneg %p105
        $region22: #{adapter_forward.1} parent=11 // pred_check_branch
          %217 = sbr.rel (%p215) target = $region24
        $region23: #{adapter_forward.1} parent=11 // pred_region
          _
        $region24: #{adapter_forward.1} parent=11 // pred_fallthru
          _
        // Predicated region
        $region25: #{adapter_forward.1} parent=11 // pred_check
          %p218 = pneg %p126
        $region26: #{adapter_forward.1} parent=11 // pred_check_branch
          %220 = sbr.rel (%p218) target = $region28
        $region27: #{adapter_forward.1} parent=11 // pred_region
          _
        $region28: #{adapter_forward.1} parent=11 // pred_fallthru
          _
        // Predicated region
        $region29: #{adapter_forward.1} parent=11 // pred_check
          %p221 = pneg %p147
        $region30: #{adapter_forward.1} parent=11 // pred_check_branch
          %223 = sbr.rel (%p221) target = $region32
        $region31: #{adapter_forward.1} parent=11 // pred_region
          _
        $region32: #{adapter_forward.1} parent=11 // pred_fallthru
          _
        // Predicated region
        $region33: #{adapter_forward.1} parent=11 // pred_check
          %p224 = pneg %p168
        $region34: #{adapter_forward.1} parent=11 // pred_check_branch
          %226 = sbr.rel (%p224) target = $region36
        $region35: #{adapter_forward.1} parent=11 // pred_region
          _
        $region36: #{adapter_forward.1} parent=11 // pred_fallthru
          _
      $region12: #{adapter_forward.1} parent=5 // pred_fallthru
        _
      %p227 = scmp.lt.s32.totalorder %s16, 2
      // Predicated region
      $region37: #{adapter_forward.1} parent=5 // pred_check
        %p228 = pneg %p227
      $region38: #{adapter_forward.1} parent=5 // pred_check_branch
        %230 = sbr.rel (%p228) target = $region40
      $region39: #{adapter_forward.1} parent=5 // pred_region
        // Predicated region
        $region41: #{adapter_forward.1} parent=39 // pred_check
          %p231 = pneg %p36
        $region42: #{adapter_forward.1} parent=39 // pred_check_branch
          %233 = sbr.rel (%p231) target = $region44
        $region43: #{adapter_forward.1} parent=39 // pred_region
          %s234 = smul.u32 2, %s16
          %p235 = scmp.lt.s32.totalorder %s234, 3
          %s236 = scalar_select %p235, %s234, 3
          %s237 = smul.addr %s236, 8
          %s238 = scalar_lea.vmem %s0, %s237
          %s239 = smul.u32 2, %s16
        $region44: #{adapter_forward.1} parent=39 // pred_fallthru
          _
      $region40: #{adapter_forward.1} parent=5 // pred_fallthru
        _
      %p240 = scmp.le.s32.totalorder 1, %s16
      %p241 = scmp.lt.s32.totalorder %s16, 3
      %p242 = pnand %p240, %p241
      %p243 = pneg %p242
      // Predicated region
      $region45: #{adapter_forward.1} parent=5 // pred_check
        _
      $region46: #{adapter_forward.1} parent=5 // pred_check_branch
        %245 = sbr.rel (%p242) target = $region48
      $region47: #{adapter_forward.1} parent=5 // pred_region
        %s246 = ssub.s32 %s16, 1
        %s247 = smul.u32 2, %s21
        %p248 = scmp.lt.s32.totalorder %s247, 3
        %s249 = scalar_select %p248, %s247, 3
        %s250 = smul.addr %s249, 8
        %s251 = scalar_lea.vmem %s0, %s250
        %p252 = pneg %p42
        %p253 = pneg %p39
        %p254 = pneg %p63
        %p255 = pneg %p60
        %p256 = pneg %p84
        %p257 = pneg %p81
        %p258 = pneg %p105
        %p259 = pneg %p102
        %p260 = pneg %p126
        %p261 = pneg %p123
        %p262 = pneg %p147
        %p263 = pneg %p144
        %p264 = pneg %p168
        %p265 = pneg %p165
        %p266 = pneg %p194
        %p267 = pneg %p191
        %s268 = sand.u32 %s181, 1
        %s269 = scalar_lea.sflag [#allocation3], %s268
        %s270 = sand.u32 %s181, 1
        %s271 = smul.addr %s270, 16
        %s272 = scalar_lea.vmem [#allocation2], %s271
        %s273 = smul.u32 2, %s21
        %p274 = scmp.lt.s32.totalorder %s273, 3
        %s275 = scalar_select %p274, %s273, 3
        %s276 = smul.addr %s275, 8
        %s277 = scalar_lea.vmem %s0, %s276
        %s278 = smul.u32 2, %s21
        %s279 = smul.u32 2, %s21
        %v280 = vld [vmem:[%s277] sm:$0xff]
        %v281 = vld [vmem:[%s277 + $0x8] sm:$0xff]
        %282 = vadd.xlane.f32.xlu0 %v280
        %v283 = vpop.xlane.xlu0 %282
        %284 = vadd.xlane.f32.xlu0 %v281
        %v285 = vpop.xlane.xlu0 %284
        %v286 = vrcp.pop 128.0
        %v287 = vmul.f32 %v283, %v286
        %v288 = vmul.f32 %v285, %v286
        %v289 = vmul.f32 %v280, %v280
        %v290 = vmul.f32 %v281, %v281
        %291 = vadd.xlane.f32.xlu0 %v289
        %v292 = vpop.xlane.xlu0 %291
        %293 = vadd.xlane.f32.xlu0 %v290
        %v294 = vpop.xlane.xlu0 %293
        %v295 = vmul.f32 %v292, %v286
        %v296 = vmul.f32 %v294, %v286
        %v297 = vmul.f32 %v287, %v287
        %v298 = vmul.f32 %v288, %v288
        %v299 = vsub.f32 %v295, %v297
        %v300 = vsub.f32 %v296, %v298
        %v301 = vsub.f32 %v280, %v287
        %v302 = vsub.f32 %v281, %v288
        %v303 = vadd.f32 %v299, 1e-05
        %v304 = vadd.f32 %v300, 1e-05
        %v305 = vrsqrt.pop %v303
        %v306 = vrsqrt.pop %v304
        %v307 = vmul.f32 %v301, %v305
        %v308 = vmul.f32 %v302, %v306
        %v309 = vld [vmem:[%s1] sm:$0x1]
        %v311 = vlaneseq
        %v312 = vshrl.u32 %v311, 7
        %v313 = vsub.s32 0, %v312
        %v314 = vrot.slane %v309, %v313
        %v316 = vmul.f32 %v307, %v314
        %v317 = vmul.f32 %v308, %v314
        %v318 = vld [vmem:[%s2] sm:$0x1]
        %v320 = vlaneseq
        %v321 = vshrl.u32 %v320, 7
        %v322 = vsub.s32 0, %v321
        %v323 = vrot.slane %v318, %v322
        %v325 = vadd.f32 %v316, %v323
        %v326 = vadd.f32 %v317, %v323
        %v327 = vld [vmem:[%s3] sm:$0xff]
        %v328 = vld [vmem:[%s3 + $0x8] sm:$0xff]
        %v329 = vld [vmem:[%s3 + $0x10] sm:$0xff]
        %v330 = vld [vmem:[%s3 + $0x18] sm:$0xff]
        %v331 = vld [vmem:[%s3 + $0x20] sm:$0xff]
        %v332 = vld [vmem:[%s3 + $0x28] sm:$0xff]
        %v333 = vld [vmem:[%s3 + $0x30] sm:$0xff]
        %v334 = vld [vmem:[%s3 + $0x38] sm:$0xff]
        %v335 = vld [vmem:[%s3 + $0x40] sm:$0xff]
        %v336 = vld [vmem:[%s3 + $0x48] sm:$0xff]
        %v337 = vld [vmem:[%s3 + $0x50] sm:$0xff]
        %v338 = vld [vmem:[%s3 + $0x58] sm:$0xff]
        %v339 = vld [vmem:[%s3 + $0x60] sm:$0xff]
        %v340 = vld [vmem:[%s3 + $0x68] sm:$0xff]
        %v341 = vld [vmem:[%s3 + $0x70] sm:$0xff]
        %v342 = vld [vmem:[%s3 + $0x78] sm:$0xff]
        %v343 = vld [vmem:[%s4] sm:$0x1]
        %v345 = vlaneseq
        %v346 = vshrl.u32 %v345, 7
        %v347 = vsub.s32 0, %v346
        %v348 = vrot.slane %v343, %v347
        %350 = vmatprep.subr.mxu0 0.0
        %351 = vmatpush1.msra.mxu0 %v327
        %352 = vmatprep.subr.mxu0 0.0
        %353 = vmatpush1.msra.mxu0 %v328
        %354 = vmatprep.subr.mxu0 0.0
        %355 = vmatpush1.msra.mxu0 %v329
        %356 = vmatprep.subr.mxu0 0.0
        %357 = vmatpush1.msra.mxu0 %v330
        %358 = vmatprep.subr.mxu0 0.0
        %359 = vmatpush1.msra.mxu0 %v331
        %360 = vmatprep.subr.mxu0 0.0
        %361 = vmatpush1.msra.mxu0 %v332
        %362 = vmatprep.subr.mxu0 0.0
        %363 = vmatpush1.msra.mxu0 %v333
        %364 = vmatprep.subr.mxu0 0.0
        %365 = vmatpush1.msra.mxu0 %v334
        %366 = vmatprep.subr.mxu0 0.0
        %367 = vmatpush1.msra.mxu0 %v335
        %368 = vmatprep.subr.mxu0 0.0
        %369 = vmatpush1.msra.mxu0 %v336
        %370 = vmatprep.subr.mxu0 0.0
        %371 = vmatpush1.msra.mxu0 %v337
        %372 = vmatprep.subr.mxu0 0.0
        %373 = vmatpush1.msra.mxu0 %v338
        %374 = vmatprep.subr.mxu0 0.0
        %375 = vmatpush1.msra.mxu0 %v339
        %376 = vmatprep.subr.mxu0 0.0
        %377 = vmatpush1.msra.mxu0 %v340
        %378 = vmatprep.subr.mxu0 0.0
        %379 = vmatpush1.msra.mxu0 %v341
        %380 = vmatprep.subr.mxu0 0.0
        %381 = vmatpush1.msra.mxu0 %v342
        %382 = vmatprep.subr.mxu0 0.0
        %383 = vmatpush1.msra.mxu0 0.0
        %384 = vmatprep.subr.mxu0 0.0
        %385 = vmatpush1.msra.mxu0 0.0
        %386 = vmatprep.subr.mxu0 0.0
        %387 = vmatpush1.msra.mxu0 0.0
        %388 = vmatprep.subr.mxu0 0.0
        %389 = vmatpush1.msra.mxu0 0.0
        %390 = vmatprep.subr.mxu0 0.0
        %391 = vmatpush1.msra.mxu0 0.0
        %392 = vmatprep.subr.mxu0 0.0
        %393 = vmatpush1.msra.mxu0 0.0
        %394 = vmatprep.subr.mxu0 0.0
        %395 = vmatpush1.msra.mxu0 0.0
        %396 = vmatprep.subr.mxu0 0.0
        %397 = vmatpush1.msra.mxu0 0.0
        %398 = vmatprep.subr.mxu0 0.0
        %399 = vmatpush1.msra.mxu0 0.0
        %400 = vmatprep.subr.mxu0 0.0
        %401 = vmatpush1.msra.mxu0 0.0
        %402 = vmatprep.subr.mxu0 0.0
        %403 = vmatpush1.msra.mxu0 0.0
        %404 = vmatprep.subr.mxu0 0.0
        %405 = vmatpush1.msra.mxu0 0.0
        %406 = vmatprep.subr.mxu0 0.0
        %407 = vmatpush1.msra.mxu0 0.0
        %408 = vmatprep.subr.mxu0 0.0
        %409 = vmatpush1.msra.mxu0 0.0
        %410 = vmatprep.subr.mxu0 0.0
        %411 = vmatpush1.msra.mxu0 0.0
        %412 = vmatprep.subr.mxu0 0.0
        %413 = vmatpush1.msra.mxu0 0.0
        %414 = vmatprep.mubr.f32.mxu0 0.0
        %415 = vmatmul.mubr.f32.gmra.mrb[0].mxu0 %v325
        %v416 = vpop.f32.mrb[0].mxu0
        %v417 = vadd.f32 %v348, %v416
        %v418 = vpop.f32.mrb[0].mxu0
        %419 = vmatprep.mubr.f32.mxu0 0.0
        %420 = vmatmul.mubr.f32.gmra.mrb[0].mxu0 %v326
        %v421 = vpop.f32.mrb[0].mxu0
        %v422 = vadd.f32 %v348, %v421
        %v423 = vpop.f32.mrb[0].mxu0
        %424 = vdwg.mxu0
        %v425 = vmul.f32 %v417, 1.702
        %v426 = vmul.f32 %v422, 1.702
        %v427 = vxor.u32 %v425, 2147483648
        %v428 = vxor.u32 %v426, 2147483648
        %v429 = vmul.f32 %v427, 1.442695
        %v430 = vpow.pop %v429
        %v431 = vmul.f32 %v428, 1.442695
        %v432 = vpow.pop %v431
        %v433 = vadd.f32 %v430, 1.0
        %v434 = vadd.f32 %v432, 1.0
        %v435 = vrcp.pop %v433
        %v436 = vmul.f32 1.0, %v435
        %v437 = vrcp.pop %v434
        %v438 = vmul.f32 1.0, %v437
        %v439 = vmul.f32 %v417, %v436
        %v440 = vmul.f32 %v422, %v438
        %v441 = vld [vmem:[%s5] sm:$0xff]
        %v442 = vld [vmem:[%s6] sm:$0x1]
        %v444 = vlaneseq
        %v445 = vshrl.u32 %v444, 7
        %v446 = vsub.s32 0, %v445
        %v447 = vrot.slane %v442, %v446
        %vm449 = vcmask 64512
        %v451 = vsel %vm449, %v439, 0
        %v454 = vsel %vm449, %v440, 0
        %456 = vmatprep.subr.mxu0 0.0
        %457 = vmatpush1.msra.mxu0 %v441
        %458 = vmatprep.subr.mxu0 0.0
        %459 = vmatpush1.msra.mxu0 0.0
        %460 = vmatprep.subr.mxu0 0.0
        %461 = vmatpush1.msra.mxu0 0.0
        %462 = vmatprep.subr.mxu0 0.0
        %463 = vmatpush1.msra.mxu0 0.0
        %464 = vmatprep.subr.mxu0 0.0
        %465 = vmatpush1.msra.mxu0 0.0
        %466 = vmatprep.subr.mxu0 0.0
        %467 = vmatpush1.msra.mxu0 0.0
        %468 = vmatprep.subr.mxu0 0.0
        %469 = vmatpush1.msra.mxu0 0.0
        %470 = vmatprep.subr.mxu0 0.0
        %471 = vmatpush1.msra.mxu0 0.0
        %472 = vmatprep.subr.mxu0 0.0
        %473 = vmatpush1.msra.mxu0 0.0
        %474 = vmatprep.subr.mxu0 0.0
        %475 = vmatpush1.msra.mxu0 0.0
        %476 = vmatprep.subr.mxu0 0.0
        %477 = vmatpush1.msra.mxu0 0.0
        %478 = vmatprep.subr.mxu0 0.0
        %479 = vmatpush1.msra.mxu0 0.0
        %480 = vmatprep.subr.mxu0 0.0
        %481 = vmatpush1.msra.mxu0 0.0
        %482 = vmatprep.subr.mxu0 0.0
        %483 = vmatpush1.msra.mxu0 0.0
        %484 = vmatprep.subr.mxu0 0.0
        %485 = vmatpush1.msra.mxu0 0.0
        %486 = vmatprep.subr.mxu0 0.0
        %487 = vmatpush1.msra.mxu0 0.0
        %488 = vmatprep.subr.mxu0 0.0
        %489 = vmatpush1.msra.mxu0 0.0
        %490 = vmatprep.subr.mxu0 0.0
        %491 = vmatpush1.msra.mxu0 0.0
        %492 = vmatprep.subr.mxu0 0.0
        %493 = vmatpush1.msra.mxu0 0.0
        %494 = vmatprep.subr.mxu0 0.0
        %495 = vmatpush1.msra.mxu0 0.0
        %496 = vmatprep.subr.mxu0 0.0
        %497 = vmatpush1.msra.mxu0 0.0
        %498 = vmatprep.subr.mxu0 0.0
        %499 = vmatpush1.msra.mxu0 0.0
        %500 = vmatprep.subr.mxu0 0.0
        %501 = vmatpush1.msra.mxu0 0.0
        %502 = vmatprep.subr.mxu0 0.0
        %503 = vmatpush1.msra.mxu0 0.0
        %504 = vmatprep.subr.mxu0 0.0
        %505 = vmatpush1.msra.mxu0 0.0
        %506 = vmatprep.subr.mxu0 0.0
        %507 = vmatpush1.msra.mxu0 0.0
        %508 = vmatprep.subr.mxu0 0.0
        %509 = vmatpush1.msra.mxu0 0.0
        %510 = vmatprep.subr.mxu0 0.0
        %511 = vmatpush1.msra.mxu0 0.0
        %512 = vmatprep.subr.mxu0 0.0
        %513 = vmatpush1.msra.mxu0 0.0
        %514 = vmatprep.subr.mxu0 0.0
        %515 = vmatpush1.msra.mxu0 0.0
        %516 = vmatprep.subr.mxu0 0.0
        %517 = vmatpush1.msra.mxu0 0.0
        %518 = vmatprep.subr.mxu0 0.0
        %519 = vmatpush1.msra.mxu0 0.0
        %520 = vmatprep.mubr.f32.mxu0 0.0
        %521 = vmatmul.mubr.f32.gmra.mrb[0].mxu0 %v451
        %v522 = vpop.f32.mrb[0].mxu0
        %v523 = vadd.f32 %v447, %v522
        %v524 = vpop.f32.mrb[0].mxu0
        %525 = vmatprep.mubr.f32.mxu0 0.0
        %526 = vmatmul.mubr.f32.gmra.mrb[0].mxu0 %v454
        %v527 = vpop.f32.mrb[0].mxu0
        %v528 = vadd.f32 %v447, %v527
        %v529 = vpop.f32.mrb[0].mxu0
        %530 = vdwg.mxu0
        %v531 = vadd.f32 %v280, %v523
        %v532 = vadd.f32 %v281, %v528
        %533 = vst [vmem:[%s272] sm:$0xff] %v531
        %534 = vst [vmem:[%s272 + $0x8] sm:$0xff] %v532
        %s535 = sand.u32 %s181, 1
        %s536 = scalar_lea.sflag [#allocation3], %s535
        %s537 = sand.u32 %s181, 1
        %s538 = smul.addr %s537, 16
        %s539 = scalar_lea.vmem [#allocation2], %s538
        // Predicated region
        $region49: #{adapter_forward.1} parent=47 // pred_check
          %p540 = pneg %p191
        $region50: #{adapter_forward.1} parent=47 // pred_check_branch
          %542 = sbr.rel (%p540) target = $region52
        $region51: #{adapter_forward.1} parent=47 // pred_region
          %s543 = smul.u32 2, %s21
          %s545 = ssub.s32 256, 256
          %546 = vsyncadd %s536, %s545
          %s547 = smul.addr %s543, 128
          %s548 = scalar_lea.hbm %s7, %s547
          %s549 = sshll.u32 %s539, 4
          %s550 = int_to_ptr.vmem [resolvable:$true] %s549
          %555 = dma.vmem_to_hbm [thread:$0]  %s550, 256, %s548, %s536, 128, 128, 8
        $region52: #{adapter_forward.1} parent=47 // pred_fallthru
          _
      $region48: #{adapter_forward.1} parent=5 // pred_fallthru
        _
      %p556 = scmp.le.s32.totalorder 2, %s16
      // Predicated region
      $region53: #{adapter_forward.1} parent=5 // pred_check
        %p557 = pneg %p556
      $region54: #{adapter_forward.1} parent=5 // pred_check_branch
        %559 = sbr.rel (%p557) target = $region56
      $region55: #{adapter_forward.1} parent=5 // pred_region
        %s560 = ssub.s32 %s16, 2
        // Predicated region
        $region57: #{adapter_forward.1} parent=55 // pred_check
          %p561 = pneg %p197
        $region58: #{adapter_forward.1} parent=55 // pred_check_branch
          %563 = sbr.rel (%p561) target = $region60
        $region59: #{adapter_forward.1} parent=55 // pred_region
          %s564 = sand.u32 %s182, 1
          %s565 = scalar_lea.sflag [#allocation3], %s564
          %s566 = sand.u32 %s182, 1
          %s567 = smul.addr %s566, 16
          %s568 = scalar_lea.vmem [#allocation2], %s567
          %569 = dma.done %s565, 256
        $region60: #{adapter_forward.1} parent=55 // pred_fallthru
          _
      $region56: #{adapter_forward.1} parent=5 // pred_fallthru
        _
    $region6: #{adapter_forward.1} parent=1 // loop_footer
      %s20 = sadd.s32 1, %s16
    $region7: #{adapter_forward.1} parent=1 // loop_footer_branch
      %15 = sbr.rel target = $region3
    $region8: #{adapter_forward.1} parent=1 // loop_exit
      _
    %570 = vsyncpa [#allocation3], 1
    %s571 = scalar_lea.sflag [#allocation3], 1
    %572 = vsyncpa %s571, 1

</llo_original>
